<compile_context>
chip_gen: v5e
topology: v5e:2x2
jax: 0.10.0
libtpu: 0.0.40
codegen_flags: <defaults>
</compile_context>

<pallas_src>
import jax
import jax.numpy as jnp
from jax.experimental import pallas as pl
from jax.experimental.pallas import tpu as pltpu

# Module hyper-parameters (from the PyTorch spec)
INPUT_DIM = 5000      # vocab size
EMBEDDING_DIM = 100
HIDDEN_DIM = 128
OUTPUT_DIM = 5

# Lane-aligned padded sizes used inside the kernels (zero-padding is numerically free).
E_PAD = 128           # embedding dim 100 -> 128 (lane-dense K for the input matmul)
O_PAD = 128           # output dim 5 -> 128 (lane-dense output store; sliced in wrapper)

VMEM_LIMIT_BYTES = 32 * 1024 * 1024   # safe on v5e/v6e/v7x; raises v5e's 16 MiB default


def _round_up(x, m):
    return ((x + m - 1) // m) * m


def _largest_divisor_leq(n, cap):
    for d in range(min(n, cap), 0, -1):
        if n % d == 0:
            return d
    return 1


# ---------------------------------------------------------------------------
# Stage 1: input projection  P = X @ W_ih^T + (b_ih + b_hh)
# One large, row-tiled, fully parallel MXU matmul (removed from the serial chain).
# ---------------------------------------------------------------------------
def proj_kernel(x_ref,      # [Rt, E_PAD]
                wih_ref,    # [E_PAD, H]  = W_ih^T (zero-padded rows)
                bias_ref,   # [1, H]      = b_ih + b_hh (folded once)
                p_ref):     # [Rt, H]
    p_ref[...] = (
        jnp.dot(x_ref[...], wih_ref[...], preferred_element_type=jnp.float32)
        + bias_ref[...]
    )


def input_projection(x2, wih_t_pad, bias):
    """x2: [R, E_PAD] f32 (R a multiple of 8). Returns [R, HIDDEN_DIM] f32."""
    R = x2.shape[0]
    row_tile = min(512, R)                         # R is sublane-aligned already
    r_pad = _round_up(R, row_tile)
    if r_pad != R:
        x2 = jnp.pad(x2, ((0, r_pad - R), (0, 0)))

    p = pl.pallas_call(
        proj_kernel,
        out_shape=jax.ShapeDtypeStruct((r_pad, HIDDEN_DIM), jnp.float32),
        grid_spec=pltpu.PrefetchScalarGridSpec(
            num_scalar_prefetch=0,
            grid=(r_pad // row_tile,),
            in_specs=[
                pl.BlockSpec((row_tile, E_PAD), lambda r: (r, 0)),
                pl.BlockSpec((E_PAD, HIDDEN_DIM), lambda r: (0, 0)),
                pl.BlockSpec((1, HIDDEN_DIM), lambda r: (0, 0)),
            ],
            out_specs=pl.BlockSpec((row_tile, HIDDEN_DIM), lambda r: (r, 0)),
        ),
        compiler_params=pltpu.CompilerParams(
            dimension_semantics=("parallel",),
            vmem_limit_bytes=VMEM_LIMIT_BYTES,
        ),
    )(x2, wih_t_pad, bias)
    return p[:R]


# ---------------------------------------------------------------------------
# Stage 2: serial recurrence over time + final FC, time-tiled with a grid.
#   h_t = tanh(P[t] + h_{t-1} @ W_hh^T)   (biases already folded into P)
#   out = h_T @ W_fc^T + b_fc             (lane-dense O_PAD-wide store)
# Hidden state lives in a VMEM scratch carried across grid steps; the P time-tile
# is auto double-buffered by BlockSpec so the next chunk DMAs while we compute.
# ---------------------------------------------------------------------------
def rnn_recur_kernel(p_ref,       # [Tt, Bp, H]  projected inputs for this time tile
                     whh_ref,     # [H, H]       = W_hh^T (constant index map -> resident)
                     wfc_ref,     # [H, O_PAD]   = W_fc^T zero-padded
                     bfc_ref,     # [1, O_PAD]
                     out_ref,     # [Bp, O_PAD]
                     h_scratch):  # VMEM [Bp, H] carried hidden state
    @pl.when(pl.program_id(0) == 0)
    def _():
        h_scratch[...] = jnp.zeros_like(h_scratch)

    t_tile = p_ref.shape[0]
    whh = whh_ref[...]            # hoist the load once per tile

    def step(t, h):
        return jnp.tanh(
            p_ref[t] + jnp.dot(h, whh, preferred_element_type=jnp.float32)
        )

    # Fully-unrolled serial loop (latency-bound chain); unrolling lets the scheduler
    # overlap the next P[t] load and EUP tanh with the MXU work of adjacent steps.
    h = jax.lax.fori_loop(0, t_tile, step, h_scratch[...], unroll=True)
    h_scratch[...] = h

    @pl.when(pl.program_id(0) == pl.num_programs(0) - 1)
    def _():
        out_ref[...] = (
            jnp.dot(h, wfc_ref[...], preferred_element_type=jnp.float32)
            + bfc_ref[...]
        )


@jax.jit
def recurrent_nn_forward(tokens, params):
    """tokens: int32 [B, T]. Returns float32 [B, OUTPUT_DIM]."""
    emb_table, w_ih, w_hh, b_ih, b_hh, w_fc, b_fc = params
    B, T = tokens.shape
    B_pad = _round_up(B, 8)       # sublane-align the batch; rows are independent

    # --- glue: pad weights to lane-aligned shapes (zero pad; numerically exact) ---
    emb_pad = jnp.pad(emb_table, ((0, 0), (0, E_PAD - EMBEDDING_DIM)))   # [V, 128]
    wih_t_pad = jnp.pad(w_ih.T, ((0, E_PAD - EMBEDDING_DIM), (0, 0)))    # [128, H]
    whh_t = w_hh.T                                                       # [H, H]
    bias = (b_ih + b_hh).reshape(1, HIDDEN_DIM)                          # folded once
    wfc_t_pad = jnp.pad(w_fc.T, ((0, 0), (0, O_PAD - OUTPUT_DIM)))       # [H, 128]
    bfc_pad = jnp.pad(b_fc, (0, O_PAD - OUTPUT_DIM)).reshape(1, O_PAD)

    # --- glue: pad batch (padded rows use token 0; they never affect real rows) ---
    if B_pad != B:
        tokens = jnp.pad(tokens, ((0, B_pad - B), (0, 0)))

    # --- glue: embedding gather, built directly time-major [T, B_pad, E_PAD] ---
    x_tm = jnp.take(emb_pad, tokens.T, axis=0)

    # --- stage 1: hoisted input projection (one big parallel matmul) ---
    p2 = input_projection(x_tm.reshape(T * B_pad, E_PAD), wih_t_pad, bias)  # [T*Bp, H]
    p = p2.reshape(T, B_pad, HIDDEN_DIM)                                    # [T, Bp, H]

    # --- stage 2: serial recurrence + fused FC ---
    t_tile = _largest_divisor_leq(T, 32)
    grid = (T // t_tile,)

    cost = pl.CostEstimate(
        flops=2 * T * B_pad * HIDDEN_DIM * HIDDEN_DIM + 2 * B_pad * HIDDEN_DIM * O_PAD,
        transcendentals=T * B_pad * HIDDEN_DIM,
        bytes_accessed=4 * (T * B_pad * HIDDEN_DIM + HIDDEN_DIM * HIDDEN_DIM
                            + HIDDEN_DIM * O_PAD + B_pad * O_PAD),
    )

    out_pad = pl.pallas_call(
        rnn_recur_kernel,
        out_shape=jax.ShapeDtypeStruct((B_pad, O_PAD), jnp.float32),
        grid_spec=pltpu.PrefetchScalarGridSpec(
            num_scalar_prefetch=0,
            grid=grid,
            in_specs=[
                pl.BlockSpec((t_tile, B_pad, HIDDEN_DIM), lambda t: (t, 0, 0)),
                pl.BlockSpec((HIDDEN_DIM, HIDDEN_DIM), lambda t: (0, 0)),
                pl.BlockSpec((HIDDEN_DIM, O_PAD), lambda t: (0, 0)),
                pl.BlockSpec((1, O_PAD), lambda t: (0, 0)),
            ],
            out_specs=pl.BlockSpec((B_pad, O_PAD), lambda t: (0, 0)),
            scratch_shapes=[pltpu.VMEM((B_pad, HIDDEN_DIM), jnp.float32)],
        ),
        compiler_params=pltpu.CompilerParams(
            dimension_semantics=("arbitrary",),   # h carried across time tiles
            vmem_limit_bytes=VMEM_LIMIT_BYTES,
        ),
        cost_estimate=cost,
    )(p, whh_t, wfc_t_pad, bfc_pad)

    return out_pad[:B, :OUTPUT_DIM]


def make_params(key):
    ks = jax.random.split(key, 7)
    emb_table = jax.random.normal(ks[0], (INPUT_DIM, EMBEDDING_DIM), jnp.float32)
    # PyTorch-style shapes: W_ih [H, E], W_hh [H, H], fc W [O, H]
    scale_rnn = 1.0 / jnp.sqrt(HIDDEN_DIM)
    w_ih = jax.random.uniform(ks[1], (HIDDEN_DIM, EMBEDDING_DIM), jnp.float32,
                              -scale_rnn, scale_rnn)
    w_hh = jax.random.uniform(ks[2], (HIDDEN_DIM, HIDDEN_DIM), jnp.float32,
                              -scale_rnn, scale_rnn)
    b_ih = jax.random.uniform(ks[3], (HIDDEN_DIM,), jnp.float32, -scale_rnn, scale_rnn)
    b_hh = jax.random.uniform(ks[4], (HIDDEN_DIM,), jnp.float32, -scale_rnn, scale_rnn)
    scale_fc = 1.0 / jnp.sqrt(HIDDEN_DIM)
    w_fc = jax.random.uniform(ks[5], (OUTPUT_DIM, HIDDEN_DIM), jnp.float32,
                              -scale_fc, scale_fc)
    b_fc = jax.random.uniform(ks[6], (OUTPUT_DIM,), jnp.float32, -scale_fc, scale_fc)
    return emb_table, w_ih, w_hh, b_ih, b_hh, w_fc, b_fc


def reference_forward(tokens, params):
    emb_table, w_ih, w_hh, b_ih, b_hh, w_fc, b_fc = params
    x = jnp.take(emb_table, tokens, axis=0)              # [B, T, E]
    B, T, _ = x.shape
    h = jnp.zeros((B, HIDDEN_DIM), jnp.float32)
    for t in range(T):
        h = jnp.tanh(x[:, t, :] @ w_ih.T + b_ih + h @ w_hh.T + b_hh)
    return h @ w_fc.T + b_fc


if __name__ == "__main__":
    key = jax.random.PRNGKey(0)
    pkey, xkey = jax.random.split(key)
    params = make_params(pkey)

    # Small example: batch=2, seq=8, int token ids in [0, INPUT_DIM)
    # TODO(synk): at this tiny B the MXU is latency-bound; real workloads should batch more.
    B, T = 2, 8
    tokens = jax.random.randint(xkey, (B, T), 0, INPUT_DIM, dtype=jnp.int32)

    out = recurrent_nn_forward(tokens, params)
    out = jax.block_until_ready(out)

    ref = reference_forward(tokens, params)
    assert out.shape == (B, OUTPUT_DIM)
    assert jnp.allclose(out, ref, atol=1e-4, rtol=1e-4), (out, ref)

    print("KERNEL_OK")
</pallas_src>

<mosaic_0001>
module attributes {stable_mosaic.version = 11 : i64} {
  func.func @rnn_recur_kernel(%arg0: i32, %arg1: memref<8x8x128xf32, #tpu.memory_space<vmem>>, %arg2: memref<128x128xf32, #tpu.memory_space<vmem>>, %arg3: memref<128x128xf32, #tpu.memory_space<vmem>>, %arg4: memref<1x128xf32, #tpu.memory_space<vmem>>, %arg5: memref<8x128xf32, #tpu.memory_space<vmem>>, %arg6: memref<8x128xf32, #tpu.memory_space<vmem>>) attributes {dimension_semantics = [#tpu.dimension_semantics<arbitrary>], iteration_bounds = array<i64: 1>, scalar_prefetch = 0 : i64, scratch_operands = 1 : i64, tpu.core_type = #tpu.core_type<tc>, window_params = [{transform_indices = @transform_0, window_bounds = array<i64: 8, 8, 128>}, {pipeline_mode = #tpu.pipeline_mode<synchronous>, transform_indices = @transform_1, window_bounds = array<i64: 128, 128>}, {pipeline_mode = #tpu.pipeline_mode<synchronous>, transform_indices = @transform_2, window_bounds = array<i64: 128, 128>}, {pipeline_mode = #tpu.pipeline_mode<synchronous>, transform_indices = @transform_3, window_bounds = array<i64: 1, 128>}, {pipeline_mode = #tpu.pipeline_mode<synchronous>, transform_indices = @transform_4, window_bounds = array<i64: 8, 128>}]} {
    %c0_i32 = arith.constant 0 : i32
    %0 = arith.cmpi eq, %arg0, %c0_i32 : i32
    %1 = arith.extui %0 : i1 to i32
    %c0_i32_0 = arith.constant 0 : i32
    %2 = arith.cmpi ne, %1, %c0_i32_0 : i32
    scf.if %2 {
      %cst_32 = arith.constant 0.000000e+00 : f32
      %57 = vector.broadcast %cst_32 : f32 to vector<8x128xf32>
      %c0_33 = arith.constant 0 : index
      %c0_34 = arith.constant 0 : index
      %58 = vector.load %arg6[%c0_33, %c0_34] : memref<8x128xf32, #tpu.memory_space<vmem>>, vector<8x128xf32>
      tpu.vector_store %arg6[%c0_33, %c0_34], %57 {strides = array<i32>} : memref<8x128xf32, #tpu.memory_space<vmem>>, vector<8x128xf32>,
    } else {
    }
    %c0 = arith.constant 0 : index
    %c0_1 = arith.constant 0 : index
    %3 = vector.load %arg2[%c0, %c0_1] : memref<128x128xf32, #tpu.memory_space<vmem>>, vector<128x128xf32>
    %c0_2 = arith.constant 0 : index
    %c0_3 = arith.constant 0 : index
    %4 = vector.load %arg6[%c0_2, %c0_3] : memref<8x128xf32, #tpu.memory_space<vmem>>, vector<8x128xf32>
    %c0_i32_4 = arith.constant 0 : i32
    %5 = arith.index_cast %c0_i32_4 : i32 to index
    %c0_5 = arith.constant 0 : index
    %c0_6 = arith.constant 0 : index
    %6 = vector.load %arg1[%5, %c0_5, %c0_6] : memref<8x8x128xf32, #tpu.memory_space<vmem>>, vector<1x8x128xf32>
    %7 = vector.shape_cast %6 : vector<1x8x128xf32> to vector<8x128xf32>
    %cst = arith.constant dense<0.000000e+00> : vector<8x128xf32>
    %8 = tpu.matmul %4, %3, %cst {dimension_numbers = #tpu.dot_dimension_numbers<[1], [0], [0], [1], [0, 0, 1, 1], [], []>} : vector<8x128xf32>, vector<128x128xf32>, vector<8x128xf32> -> vector<8x128xf32>
    %9 = arith.addf %7, %8 : vector<8x128xf32>
    %10 = math.tanh %9 : vector<8x128xf32>
    %c1_i32 = arith.constant 1 : i32
    %11 = arith.index_cast %c1_i32 : i32 to index
    %c0_7 = arith.constant 0 : index
    %c0_8 = arith.constant 0 : index
    %12 = vector.load %arg1[%11, %c0_7, %c0_8] : memref<8x8x128xf32, #tpu.memory_space<vmem>>, vector<1x8x128xf32>
    %13 = vector.shape_cast %12 : vector<1x8x128xf32> to vector<8x128xf32>
    %cst_9 = arith.constant dense<0.000000e+00> : vector<8x128xf32>
    %14 = tpu.matmul %10, %3, %cst_9 {dimension_numbers = #tpu.dot_dimension_numbers<[1], [0], [0], [1], [0, 0, 1, 1], [], []>} : vector<8x128xf32>, vector<128x128xf32>, vector<8x128xf32> -> vector<8x128xf32>
    %15 = arith.addf %13, %14 : vector<8x128xf32>
    %16 = math.tanh %15 : vector<8x128xf32>
    %c2_i32 = arith.constant 2 : i32
    %17 = arith.index_cast %c2_i32 : i32 to index
    %c0_10 = arith.constant 0 : index
    %c0_11 = arith.constant 0 : index
    %18 = vector.load %arg1[%17, %c0_10, %c0_11] : memref<8x8x128xf32, #tpu.memory_space<vmem>>, vector<1x8x128xf32>
    %19 = vector.shape_cast %18 : vector<1x8x128xf32> to vector<8x128xf32>
    %cst_12 = arith.constant dense<0.000000e+00> : vector<8x128xf32>
    %20 = tpu.matmul %16, %3, %cst_12 {dimension_numbers = #tpu.dot_dimension_numbers<[1], [0], [0], [1], [0, 0, 1, 1], [], []>} : vector<8x128xf32>, vector<128x128xf32>, vector<8x128xf32> -> vector<8x128xf32>
    %21 = arith.addf %19, %20 : vector<8x128xf32>
    %22 = math.tanh %21 : vector<8x128xf32>
    %c3_i32 = arith.constant 3 : i32
    %23 = arith.index_cast %c3_i32 : i32 to index
    %c0_13 = arith.constant 0 : index
    %c0_14 = arith.constant 0 : index
    %24 = vector.load %arg1[%23, %c0_13, %c0_14] : memref<8x8x128xf32, #tpu.memory_space<vmem>>, vector<1x8x128xf32>
    %25 = vector.shape_cast %24 : vector<1x8x128xf32> to vector<8x128xf32>
    %cst_15 = arith.constant dense<0.000000e+00> : vector<8x128xf32>
    %26 = tpu.matmul %22, %3, %cst_15 {dimension_numbers = #tpu.dot_dimension_numbers<[1], [0], [0], [1], [0, 0, 1, 1], [], []>} : vector<8x128xf32>, vector<128x128xf32>, vector<8x128xf32> -> vector<8x128xf32>
    %27 = arith.addf %25, %26 : vector<8x128xf32>
    %28 = math.tanh %27 : vector<8x128xf32>
    %c4_i32 = arith.constant 4 : i32
    %29 = arith.index_cast %c4_i32 : i32 to index
    %c0_16 = arith.constant 0 : index
    %c0_17 = arith.constant 0 : index
    %30 = vector.load %arg1[%29, %c0_16, %c0_17] : memref<8x8x128xf32, #tpu.memory_space<vmem>>, vector<1x8x128xf32>
    %31 = vector.shape_cast %30 : vector<1x8x128xf32> to vector<8x128xf32>
    %cst_18 = arith.constant dense<0.000000e+00> : vector<8x128xf32>
    %32 = tpu.matmul %28, %3, %cst_18 {dimension_numbers = #tpu.dot_dimension_numbers<[1], [0], [0], [1], [0, 0, 1, 1], [], []>} : vector<8x128xf32>, vector<128x128xf32>, vector<8x128xf32> -> vector<8x128xf32>
    %33 = arith.addf %31, %32 : vector<8x128xf32>
    %34 = math.tanh %33 : vector<8x128xf32>
    %c5_i32 = arith.constant 5 : i32
    %35 = arith.index_cast %c5_i32 : i32 to index
    %c0_19 = arith.constant 0 : index
    %c0_20 = arith.constant 0 : index
    %36 = vector.load %arg1[%35, %c0_19, %c0_20] : memref<8x8x128xf32, #tpu.memory_space<vmem>>, vector<1x8x128xf32>
    %37 = vector.shape_cast %36 : vector<1x8x128xf32> to vector<8x128xf32>
    %cst_21 = arith.constant dense<0.000000e+00> : vector<8x128xf32>
    %38 = tpu.matmul %34, %3, %cst_21 {dimension_numbers = #tpu.dot_dimension_numbers<[1], [0], [0], [1], [0, 0, 1, 1], [], []>} : vector<8x128xf32>, vector<128x128xf32>, vector<8x128xf32> -> vector<8x128xf32>
    %39 = arith.addf %37, %38 : vector<8x128xf32>
    %40 = math.tanh %39 : vector<8x128xf32>
    %c6_i32 = arith.constant 6 : i32
    %41 = arith.index_cast %c6_i32 : i32 to index
    %c0_22 = arith.constant 0 : index
    %c0_23 = arith.constant 0 : index
    %42 = vector.load %arg1[%41, %c0_22, %c0_23] : memref<8x8x128xf32, #tpu.memory_space<vmem>>, vector<1x8x128xf32>
    %43 = vector.shape_cast %42 : vector<1x8x128xf32> to vector<8x128xf32>
    %cst_24 = arith.constant dense<0.000000e+00> : vector<8x128xf32>
    %44 = tpu.matmul %40, %3, %cst_24 {dimension_numbers = #tpu.dot_dimension_numbers<[1], [0], [0], [1], [0, 0, 1, 1], [], []>} : vector<8x128xf32>, vector<128x128xf32>, vector<8x128xf32> -> vector<8x128xf32>
    %45 = arith.addf %43, %44 : vector<8x128xf32>
    %46 = math.tanh %45 : vector<8x128xf32>
    %c7_i32 = arith.constant 7 : i32
    %47 = arith.index_cast %c7_i32 : i32 to index
    %c0_25 = arith.constant 0 : index
    %c0_26 = arith.constant 0 : index
    %48 = vector.load %arg1[%47, %c0_25, %c0_26] : memref<8x8x128xf32, #tpu.memory_space<vmem>>, vector<1x8x128xf32>
    %49 = vector.shape_cast %48 : vector<1x8x128xf32> to vector<8x128xf32>
    %cst_27 = arith.constant dense<0.000000e+00> : vector<8x128xf32>
    %50 = tpu.matmul %46, %3, %cst_27 {dimension_numbers = #tpu.dot_dimension_numbers<[1], [0], [0], [1], [0, 0, 1, 1], [], []>} : vector<8x128xf32>, vector<128x128xf32>, vector<8x128xf32> -> vector<8x128xf32>
    %51 = arith.addf %49, %50 : vector<8x128xf32>
    %52 = math.tanh %51 : vector<8x128xf32>
    %c8_i32 = arith.constant 8 : i32
    %c0_28 = arith.constant 0 : index
    %c0_29 = arith.constant 0 : index
    %53 = vector.load %arg6[%c0_28, %c0_29] : memref<8x128xf32, #tpu.memory_space<vmem>>, vector<8x128xf32>
    tpu.vector_store %arg6[%c0_28, %c0_29], %52 {strides = array<i32>} : memref<8x128xf32, #tpu.memory_space<vmem>>, vector<8x128xf32>,
    %c0_i32_30 = arith.constant 0 : i32
    %54 = arith.cmpi eq, %arg0, %c0_i32_30 : i32
    %55 = arith.extui %54 : i1 to i32
    %c0_i32_31 = arith.constant 0 : i32
    %56 = arith.cmpi ne, %55, %c0_i32_31 : i32
    scf.if %56 {
      %c0_32 = arith.constant 0 : index
      %c0_33 = arith.constant 0 : index
      %57 = vector.load %arg3[%c0_32, %c0_33] : memref<128x128xf32, #tpu.memory_space<vmem>>, vector<128x128xf32>
      %cst_34 = arith.constant dense<0.000000e+00> : vector<8x128xf32>
      %58 = tpu.matmul %52, %57, %cst_34 {dimension_numbers = #tpu.dot_dimension_numbers<[1], [0], [0], [1], [0, 0, 1, 1], [], []>} : vector<8x128xf32>, vector<128x128xf32>, vector<8x128xf32> -> vector<8x128xf32>
      %c0_35 = arith.constant 0 : index
      %c0_36 = arith.constant 0 : index
      %59 = vector.load %arg4[%c0_35, %c0_36] : memref<1x128xf32, #tpu.memory_space<vmem>>, vector<1x128xf32>
      %60 = vector.broadcast %59 : vector<1x128xf32> to vector<8x128xf32>
      %61 = arith.addf %58, %60 : vector<8x128xf32>
      %c0_37 = arith.constant 0 : index
      %c0_38 = arith.constant 0 : index
      %62 = vector.load %arg5[%c0_37, %c0_38] : memref<8x128xf32, #tpu.memory_space<vmem>>, vector<8x128xf32>
      tpu.vector_store %arg5[%c0_37, %c0_38], %61 {strides = array<i32>} : memref<8x128xf32, #tpu.memory_space<vmem>>, vector<8x128xf32>,
    } else {
    }
    return
  }
  func.func @transform_0(%arg0: i32) -> (i32, i32, i32) {
    %c0_i32 = arith.constant 0 : i32
    %c0_i32_0 = arith.constant 0 : i32
    %c0_i32_1 = arith.constant 0 : i32
    return %arg0, %c0_i32, %c0_i32_0 : i32, i32, i32
  }
  func.func @transform_1(%arg0: i32) -> (i32, i32) {
    %c0_i32 = arith.constant 0 : i32
    %c0_i32_0 = arith.constant 0 : i32
    %c0_i32_1 = arith.constant 0 : i32
    return %c0_i32, %c0_i32_0 : i32, i32
  }
  func.func @transform_2(%arg0: i32) -> (i32, i32) {
    %c0_i32 = arith.constant 0 : i32
    %c0_i32_0 = arith.constant 0 : i32
    %c0_i32_1 = arith.constant 0 : i32
    return %c0_i32, %c0_i32_0 : i32, i32
  }
  func.func @transform_3(%arg0: i32) -> (i32, i32) {
    %c0_i32 = arith.constant 0 : i32
    %c0_i32_0 = arith.constant 0 : i32
    %c0_i32_1 = arith.constant 0 : i32
    return %c0_i32, %c0_i32_0 : i32, i32
  }
  func.func @transform_4(%arg0: i32) -> (i32, i32) {
    %c0_i32 = arith.constant 0 : i32
    %c0_i32_0 = arith.constant 0 : i32
    %c0_i32_1 = arith.constant 0 : i32
    return %c0_i32, %c0_i32_0 : i32, i32
  }
}

module attributes {stable_mosaic.version = 11 : i64} {
  func.func @proj_kernel(%arg0: i32, %arg1: memref<64x128xf32, #tpu.memory_space<vmem>>, %arg2: memref<128x128xf32, #tpu.memory_space<vmem>>, %arg3: memref<1x128xf32, #tpu.memory_space<vmem>>, %arg4: memref<64x128xf32, #tpu.memory_space<vmem>>) attributes {dimension_semantics = [#tpu.dimension_semantics<parallel>], iteration_bounds = array<i64: 1>, scalar_prefetch = 0 : i64, scratch_operands = 0 : i64, tpu.core_type = #tpu.core_type<tc>, window_params = [{transform_indices = @transform_0, window_bounds = array<i64: 64, 128>}, {pipeline_mode = #tpu.pipeline_mode<synchronous>, transform_indices = @transform_1, window_bounds = array<i64: 128, 128>}, {pipeline_mode = #tpu.pipeline_mode<synchronous>, transform_indices = @transform_2, window_bounds = array<i64: 1, 128>}, {transform_indices = @transform_3, window_bounds = array<i64: 64, 128>}]} {
    %c0 = arith.constant 0 : index
    %c0_0 = arith.constant 0 : index
    %0 = vector.load %arg1[%c0, %c0_0] : memref<64x128xf32, #tpu.memory_space<vmem>>, vector<64x128xf32>
    %c0_1 = arith.constant 0 : index
    %c0_2 = arith.constant 0 : index
    %1 = vector.load %arg2[%c0_1, %c0_2] : memref<128x128xf32, #tpu.memory_space<vmem>>, vector<128x128xf32>
    %cst = arith.constant dense<0.000000e+00> : vector<64x128xf32>
    %2 = tpu.matmul %0, %1, %cst {dimension_numbers = #tpu.dot_dimension_numbers<[1], [0], [0], [1], [0, 0, 1, 1], [], []>} : vector<64x128xf32>, vector<128x128xf32>, vector<64x128xf32> -> vector<64x128xf32>
    %c0_3 = arith.constant 0 : index
    %c0_4 = arith.constant 0 : index
    %3 = vector.load %arg3[%c0_3, %c0_4] : memref<1x128xf32, #tpu.memory_space<vmem>>, vector<1x128xf32>
    %4 = vector.broadcast %3 : vector<1x128xf32> to vector<64x128xf32>
    %5 = arith.addf %2, %4 : vector<64x128xf32>
    %c0_5 = arith.constant 0 : index
    %c0_6 = arith.constant 0 : index
    %6 = vector.load %arg4[%c0_5, %c0_6] : memref<64x128xf32, #tpu.memory_space<vmem>>, vector<64x128xf32>
    tpu.vector_store %arg4[%c0_5, %c0_6], %5 {strides = array<i32>} : memref<64x128xf32, #tpu.memory_space<vmem>>, vector<64x128xf32>,
    return
  }
  func.func @transform_0(%arg0: i32) -> (i32, i32) {
    %c0_i32 = arith.constant 0 : i32
    %c0_i32_0 = arith.constant 0 : i32
    return %arg0, %c0_i32 : i32, i32
  }
  func.func @transform_1(%arg0: i32) -> (i32, i32) {
    %c0_i32 = arith.constant 0 : i32
    %c0_i32_0 = arith.constant 0 : i32
    %c0_i32_1 = arith.constant 0 : i32
    return %c0_i32, %c0_i32_0 : i32, i32
  }
  func.func @transform_2(%arg0: i32) -> (i32, i32) {
    %c0_i32 = arith.constant 0 : i32
    %c0_i32_0 = arith.constant 0 : i32
    %c0_i32_1 = arith.constant 0 : i32
    return %c0_i32, %c0_i32_0 : i32, i32
  }
  func.func @transform_3(%arg0: i32) -> (i32, i32) {
    %c0_i32 = arith.constant 0 : i32
    %c0_i32_0 = arith.constant 0 : i32
    return %arg0, %c0_i32 : i32, i32
  }
}

</mosaic_0001>

<llo_original>
// kernel: recurrent_nn_forward.2
$region0: #{recurrent_nn_forward.2}
  #allocation0 [shape = 'u32[]', space=smem, size = 0x4, offset = 0x4, fixed_abs, tag = 'smem constant byte address 0x4 - core index']
  #allocation1 [shape = 'u32[72,128]{1,0:T(1,128)}', space=vmem, size = 0x9000, scoped, tag = 'internal scratch']
  %s0 = inlined_call_operand.vmem [shape: f32[64,128], index: 0, kind: input, shape index: {}]
  %s1 = inlined_call_operand.vmem [shape: f32[128,128], index: 1, kind: input, shape index: {}]
  %s2 = inlined_call_operand.vmem [shape: f32[1,128], index: 2, kind: input, shape index: {}]
  %s3 = inlined_call_operand.vmem [shape: f32[64,128], index: 3, kind: output, shape index: {}]
  %s4 = sld [smem:[#allocation0]]
  $region22: #{recurrent_nn_forward.2} parent=0
    _
  %s6 = ssub.s32 1, %s4
  %s7 = scalar_select 0, %s6, %s4
  // Predicated region
  $region2: #{recurrent_nn_forward.2} parent=0 // pred_check
    _
  $region3: #{recurrent_nn_forward.2} parent=0 // pred_check_branch
    %9 = sbr.rel (0) target = $region5
  $region4: #{recurrent_nn_forward.2} parent=0 // pred_region
    _
  $region5: #{recurrent_nn_forward.2} parent=0 // pred_fallthru
    _
  // Predicated region
  $region6: #{recurrent_nn_forward.2} parent=0 // pred_check
    _
  $region7: #{recurrent_nn_forward.2} parent=0 // pred_check_branch
    %11 = sbr.rel (0) target = $region9
  $region8: #{recurrent_nn_forward.2} parent=0 // pred_region
    _
  $region9: #{recurrent_nn_forward.2} parent=0 // pred_fallthru
    _
  // Predicated region
  $region10: #{recurrent_nn_forward.2} parent=0 // pred_check
    _
  $region11: #{recurrent_nn_forward.2} parent=0 // pred_check_branch
    %13 = sbr.rel (0) target = $region13
  $region12: #{recurrent_nn_forward.2} parent=0 // pred_region
    _
  $region13: #{recurrent_nn_forward.2} parent=0 // pred_fallthru
    _
  %v14 = vld [vmem:[%s0] sm:$0xff]
  %v15 = vld [vmem:[%s0 + $0x8] sm:$0xff]
  %v16 = vld [vmem:[%s0 + $0x10] sm:$0xff]
  %v17 = vld [vmem:[%s0 + $0x18] sm:$0xff]
  %v18 = vld [vmem:[%s0 + $0x20] sm:$0xff]
  %v19 = vld [vmem:[%s0 + $0x28] sm:$0xff]
  %v20 = vld [vmem:[%s0 + $0x30] sm:$0xff]
  %v21 = vld [vmem:[%s0 + $0x38] sm:$0xff]
  %v22 = vld [vmem:[%s1] sm:$0xff]
  %v23 = vld [vmem:[%s1 + $0x8] sm:$0xff]
  %v24 = vld [vmem:[%s1 + $0x10] sm:$0xff]
  %v25 = vld [vmem:[%s1 + $0x18] sm:$0xff]
  %v26 = vld [vmem:[%s1 + $0x20] sm:$0xff]
  %v27 = vld [vmem:[%s1 + $0x28] sm:$0xff]
  %v28 = vld [vmem:[%s1 + $0x30] sm:$0xff]
  %v29 = vld [vmem:[%s1 + $0x38] sm:$0xff]
  %v30 = vld [vmem:[%s1 + $0x40] sm:$0xff]
  %v31 = vld [vmem:[%s1 + $0x48] sm:$0xff]
  %v32 = vld [vmem:[%s1 + $0x50] sm:$0xff]
  %v33 = vld [vmem:[%s1 + $0x58] sm:$0xff]
  %v34 = vld [vmem:[%s1 + $0x60] sm:$0xff]
  %v35 = vld [vmem:[%s1 + $0x68] sm:$0xff]
  %v36 = vld [vmem:[%s1 + $0x70] sm:$0xff]
  %v37 = vld [vmem:[%s1 + $0x78] sm:$0xff]
  %v38 = vld [vmem:[%s2] sm:$0x1]
  %v40 = vperm.slane %v38, 0
  %42 = vmatpush.msra.mxu0 %v37
  %43 = vmatpush.msra.mxu0 %v36
  %44 = vmatpush.msra.mxu0 %v35
  %45 = vmatpush.msra.mxu0 %v34
  %46 = vmatpush.msra.mxu0 %v33
  %47 = vmatpush.msra.mxu0 %v32
  %48 = vmatpush.msra.mxu0 %v31
  %49 = vmatpush.msra.mxu0 %v30
  %50 = vmatpush.msra.mxu0 %v29
  %51 = vmatpush.msra.mxu0 %v28
  %52 = vmatpush.msra.mxu0 %v27
  %53 = vmatpush.msra.mxu0 %v26
  %54 = vmatpush.msra.mxu0 %v25
  %55 = vmatpush.msra.mxu0 %v24
  %56 = vmatpush.msra.mxu0 %v23
  %57 = vmatpush.msra.mxu0 %v22
  %58 = vmatmul.f32.gmra.mxu0 %v14
  %v59 = vpop.f32.mrf.mxu0
  %v60 = vadd.f32 %v40, %v59
  %61 = vmatmul.f32.gmra.mxu0 %v15
  %v62 = vpop.f32.mrf.mxu0
  %v63 = vadd.f32 %v40, %v62
  %64 = vmatmul.f32.gmra.mxu0 %v16
  %v65 = vpop.f32.mrf.mxu0
  %v66 = vadd.f32 %v40, %v65
  %67 = vmatmul.f32.gmra.mxu0 %v17
  %v68 = vpop.f32.mrf.mxu0
  %v69 = vadd.f32 %v40, %v68
  %70 = vmatmul.f32.gmra.mxu0 %v18
  %v71 = vpop.f32.mrf.mxu0
  %v72 = vadd.f32 %v40, %v71
  %73 = vmatmul.f32.gmra.mxu0 %v19
  %v74 = vpop.f32.mrf.mxu0
  %v75 = vadd.f32 %v40, %v74
  %76 = vmatmul.f32.gmra.mxu0 %v20
  %v77 = vpop.f32.mrf.mxu0
  %v78 = vadd.f32 %v40, %v77
  %79 = vmatmul.f32.gmra.mxu0 %v21
  %v80 = vpop.f32.mrf.mxu0
  %v81 = vadd.f32 %v40, %v80
  %82 = vdwg.mxu0
  %83 = vst [vmem:[%s3] sm:$0xff] %v60
  %84 = vst [vmem:[%s3 + $0x8] sm:$0xff] %v63
  %85 = vst [vmem:[%s3 + $0x10] sm:$0xff] %v66
  %86 = vst [vmem:[%s3 + $0x18] sm:$0xff] %v69
  %87 = vst [vmem:[%s3 + $0x20] sm:$0xff] %v72
  %88 = vst [vmem:[%s3 + $0x28] sm:$0xff] %v75
  %89 = vst [vmem:[%s3 + $0x30] sm:$0xff] %v78
  %90 = vst [vmem:[%s3 + $0x38] sm:$0xff] %v81
  // Predicated region
  $region14: #{recurrent_nn_forward.2} parent=0 // pred_check
    _
  $region15: #{recurrent_nn_forward.2} parent=0 // pred_check_branch
    %92 = sbr.rel (0) target = $region17
  $region16: #{recurrent_nn_forward.2} parent=0 // pred_region
    _
  $region17: #{recurrent_nn_forward.2} parent=0 // pred_fallthru
    _
  // Predicated region
  $region18: #{recurrent_nn_forward.2} parent=0 // pred_check
    _
  $region19: #{recurrent_nn_forward.2} parent=0 // pred_check_branch
    %94 = sbr.rel (0) target = $region21
  $region20: #{recurrent_nn_forward.2} parent=0 // pred_region
    _
  $region21: #{recurrent_nn_forward.2} parent=0 // pred_fallthru
    _

// kernel: recurrent_nn_forward.3
$region0: #{recurrent_nn_forward.3}
  #allocation0 [shape = 'u32[]', space=smem, size = 0x4, offset = 0x4, fixed_abs, tag = 'smem constant byte address 0x4 - core index']
  #allocation1 [shape = 'u32[72,128]{1,0:T(1,128)}', space=vmem, size = 0x9000, scoped, tag = 'internal scratch']
  #allocation2 [shape = 'f32[8,128]{1,0:T(8,128)}', space=vmem, size = 0x1000, scoped, tag = 'scratch operand']
  %s0 = inlined_call_operand.vmem [shape: f32[8,8,128], index: 0, kind: input, shape index: {}]
  %s1 = inlined_call_operand.vmem [shape: f32[128,128], index: 1, kind: input, shape index: {}]
  %s2 = inlined_call_operand.vmem [shape: f32[128,128], index: 2, kind: input, shape index: {}]
  %s3 = inlined_call_operand.vmem [shape: f32[1,128], index: 3, kind: input, shape index: {}]
  %s4 = inlined_call_operand.vmem [shape: f32[8,128], index: 4, kind: output, shape index: {}]
  %s5 = sld [smem:[#allocation0]]
  $region34: #{recurrent_nn_forward.3} parent=0
    _
  %s7 = ssub.s32 1, %s5
  %s8 = scalar_select 0, %s7, %s5
  // Predicated region
  $region2: #{recurrent_nn_forward.3} parent=0 // pred_check
    _
  $region3: #{recurrent_nn_forward.3} parent=0 // pred_check_branch
    %10 = sbr.rel (0) target = $region5
  $region4: #{recurrent_nn_forward.3} parent=0 // pred_region
    _
  $region5: #{recurrent_nn_forward.3} parent=0 // pred_fallthru
    _
  // Predicated region
  $region6: #{recurrent_nn_forward.3} parent=0 // pred_check
    _
  $region7: #{recurrent_nn_forward.3} parent=0 // pred_check_branch
    %12 = sbr.rel (0) target = $region9
  $region8: #{recurrent_nn_forward.3} parent=0 // pred_region
    _
  $region9: #{recurrent_nn_forward.3} parent=0 // pred_fallthru
    _
  // Predicated region
  $region10: #{recurrent_nn_forward.3} parent=0 // pred_check
    _
  $region11: #{recurrent_nn_forward.3} parent=0 // pred_check_branch
    %14 = sbr.rel (0) target = $region13
  $region12: #{recurrent_nn_forward.3} parent=0 // pred_region
    _
  $region13: #{recurrent_nn_forward.3} parent=0 // pred_fallthru
    _
  // Predicated region
  $region14: #{recurrent_nn_forward.3} parent=0 // pred_check
    _
  $region15: #{recurrent_nn_forward.3} parent=0 // pred_check_branch
    %16 = sbr.rel (0) target = $region17
  $region16: #{recurrent_nn_forward.3} parent=0 // pred_region
    _
  $region17: #{recurrent_nn_forward.3} parent=0 // pred_fallthru
    _
  %p17 = scmp.eq.s32.totalorder 0, 0
  // Predicated region
  $region18: #{recurrent_nn_forward.3} parent=0 // pred_check
    %p18 = pneg %p17
  $region19: #{recurrent_nn_forward.3} parent=0 // pred_check_branch
    %20 = sbr.rel (%p18) target = $region21
  $region20: #{recurrent_nn_forward.3} parent=0 // pred_region
    %21 = vst [vmem:[#allocation2] sm:$0xff] 0.0
  $region21: #{recurrent_nn_forward.3} parent=0 // pred_fallthru
    _
  %v22 = vld [vmem:[%s1] sm:$0xff]
  %v23 = vld [vmem:[%s1 + $0x8] sm:$0xff]
  %v24 = vld [vmem:[%s1 + $0x10] sm:$0xff]
  %v25 = vld [vmem:[%s1 + $0x18] sm:$0xff]
  %v26 = vld [vmem:[%s1 + $0x20] sm:$0xff]
  %v27 = vld [vmem:[%s1 + $0x28] sm:$0xff]
  %v28 = vld [vmem:[%s1 + $0x30] sm:$0xff]
  %v29 = vld [vmem:[%s1 + $0x38] sm:$0xff]
  %v30 = vld [vmem:[%s1 + $0x40] sm:$0xff]
  %v31 = vld [vmem:[%s1 + $0x48] sm:$0xff]
  %v32 = vld [vmem:[%s1 + $0x50] sm:$0xff]
  %v33 = vld [vmem:[%s1 + $0x58] sm:$0xff]
  %v34 = vld [vmem:[%s1 + $0x60] sm:$0xff]
  %v35 = vld [vmem:[%s1 + $0x68] sm:$0xff]
  %v36 = vld [vmem:[%s1 + $0x70] sm:$0xff]
  %v37 = vld [vmem:[%s1 + $0x78] sm:$0xff]
  %v38 = vld [vmem:[#allocation2] sm:$0xff]
  %v39 = vld [vmem:[%s0] sm:$0xff]
  %40 = vmatpush.msra.mxu0 %v37
  %41 = vmatpush.msra.mxu0 %v36
  %42 = vmatpush.msra.mxu0 %v35
  %43 = vmatpush.msra.mxu0 %v34
  %44 = vmatpush.msra.mxu0 %v33
  %45 = vmatpush.msra.mxu0 %v32
  %46 = vmatpush.msra.mxu0 %v31
  %47 = vmatpush.msra.mxu0 %v30
  %48 = vmatpush.msra.mxu0 %v29
  %49 = vmatpush.msra.mxu0 %v28
  %50 = vmatpush.msra.mxu0 %v27
  %51 = vmatpush.msra.mxu0 %v26
  %52 = vmatpush.msra.mxu0 %v25
  %53 = vmatpush.msra.mxu0 %v24
  %54 = vmatpush.msra.mxu0 %v23
  %55 = vmatpush.msra.mxu0 %v22
  %56 = vmatmul.f32.gmra.mxu0 %v38
  %v57 = vpop.f32.mrf.mxu0
  %v58 = vadd.f32 0.0, %v57
  %59 = vdwg.mxu0
  %v60 = vadd.f32 %v39, %v58
  %v61 = vtanh.pop %v60
  %s62 = scalar_lea.vmem %s0, 8
  %v63 = vld [vmem:[%s62] sm:$0xff]
  %64 = vmatpush.msra.mxu0 %v37
  %65 = vmatpush.msra.mxu0 %v36
  %66 = vmatpush.msra.mxu0 %v35
  %67 = vmatpush.msra.mxu0 %v34
  %68 = vmatpush.msra.mxu0 %v33
  %69 = vmatpush.msra.mxu0 %v32
  %70 = vmatpush.msra.mxu0 %v31
  %71 = vmatpush.msra.mxu0 %v30
  %72 = vmatpush.msra.mxu0 %v29
  %73 = vmatpush.msra.mxu0 %v28
  %74 = vmatpush.msra.mxu0 %v27
  %75 = vmatpush.msra.mxu0 %v26
  %76 = vmatpush.msra.mxu0 %v25
  %77 = vmatpush.msra.mxu0 %v24
  %78 = vmatpush.msra.mxu0 %v23
  %79 = vmatpush.msra.mxu0 %v22
  %80 = vmatmul.f32.gmra.mxu0 %v61
  %v81 = vpop.f32.mrf.mxu0
  %v82 = vadd.f32 0.0, %v81
  %83 = vdwg.mxu0
  %v84 = vadd.f32 %v63, %v82
  %v85 = vtanh.pop %v84
  %s86 = scalar_lea.vmem %s0, 16
  %v87 = vld [vmem:[%s86] sm:$0xff]
  %88 = vmatpush.msra.mxu0 %v37
  %89 = vmatpush.msra.mxu0 %v36
  %90 = vmatpush.msra.mxu0 %v35
  %91 = vmatpush.msra.mxu0 %v34
  %92 = vmatpush.msra.mxu0 %v33
  %93 = vmatpush.msra.mxu0 %v32
  %94 = vmatpush.msra.mxu0 %v31
  %95 = vmatpush.msra.mxu0 %v30
  %96 = vmatpush.msra.mxu0 %v29
  %97 = vmatpush.msra.mxu0 %v28
  %98 = vmatpush.msra.mxu0 %v27
  %99 = vmatpush.msra.mxu0 %v26
  %100 = vmatpush.msra.mxu0 %v25
  %101 = vmatpush.msra.mxu0 %v24
  %102 = vmatpush.msra.mxu0 %v23
  %103 = vmatpush.msra.mxu0 %v22
  %104 = vmatmul.f32.gmra.mxu0 %v85
  %v105 = vpop.f32.mrf.mxu0
  %v106 = vadd.f32 0.0, %v105
  %107 = vdwg.mxu0
  %v108 = vadd.f32 %v87, %v106
  %v109 = vtanh.pop %v108
  %s110 = scalar_lea.vmem %s0, 24
  %v111 = vld [vmem:[%s110] sm:$0xff]
  %112 = vmatpush.msra.mxu0 %v37
  %113 = vmatpush.msra.mxu0 %v36
  %114 = vmatpush.msra.mxu0 %v35
  %115 = vmatpush.msra.mxu0 %v34
  %116 = vmatpush.msra.mxu0 %v33
  %117 = vmatpush.msra.mxu0 %v32
  %118 = vmatpush.msra.mxu0 %v31
  %119 = vmatpush.msra.mxu0 %v30
  %120 = vmatpush.msra.mxu0 %v29
  %121 = vmatpush.msra.mxu0 %v28
  %122 = vmatpush.msra.mxu0 %v27
  %123 = vmatpush.msra.mxu0 %v26
  %124 = vmatpush.msra.mxu0 %v25
  %125 = vmatpush.msra.mxu0 %v24
  %126 = vmatpush.msra.mxu0 %v23
  %127 = vmatpush.msra.mxu0 %v22
  %128 = vmatmul.f32.gmra.mxu0 %v109
  %v129 = vpop.f32.mrf.mxu0
  %v130 = vadd.f32 0.0, %v129
  %131 = vdwg.mxu0
  %v132 = vadd.f32 %v111, %v130
  %v133 = vtanh.pop %v132
  %s134 = scalar_lea.vmem %s0, 32
  %v135 = vld [vmem:[%s134] sm:$0xff]
  %136 = vmatpush.msra.mxu0 %v37
  %137 = vmatpush.msra.mxu0 %v36
  %138 = vmatpush.msra.mxu0 %v35
  %139 = vmatpush.msra.mxu0 %v34
  %140 = vmatpush.msra.mxu0 %v33
  %141 = vmatpush.msra.mxu0 %v32
  %142 = vmatpush.msra.mxu0 %v31
  %143 = vmatpush.msra.mxu0 %v30
  %144 = vmatpush.msra.mxu0 %v29
  %145 = vmatpush.msra.mxu0 %v28
  %146 = vmatpush.msra.mxu0 %v27
  %147 = vmatpush.msra.mxu0 %v26
  %148 = vmatpush.msra.mxu0 %v25
  %149 = vmatpush.msra.mxu0 %v24
  %150 = vmatpush.msra.mxu0 %v23
  %151 = vmatpush.msra.mxu0 %v22
  %152 = vmatmul.f32.gmra.mxu0 %v133
  %v153 = vpop.f32.mrf.mxu0
  %v154 = vadd.f32 0.0, %v153
  %155 = vdwg.mxu0
  %v156 = vadd.f32 %v135, %v154
  %v157 = vtanh.pop %v156
  %s158 = scalar_lea.vmem %s0, 40
  %v159 = vld [vmem:[%s158] sm:$0xff]
  %160 = vmatpush.msra.mxu0 %v37
  %161 = vmatpush.msra.mxu0 %v36
  %162 = vmatpush.msra.mxu0 %v35
  %163 = vmatpush.msra.mxu0 %v34
  %164 = vmatpush.msra.mxu0 %v33
  %165 = vmatpush.msra.mxu0 %v32
  %166 = vmatpush.msra.mxu0 %v31
  %167 = vmatpush.msra.mxu0 %v30
  %168 = vmatpush.msra.mxu0 %v29
  %169 = vmatpush.msra.mxu0 %v28
  %170 = vmatpush.msra.mxu0 %v27
  %171 = vmatpush.msra.mxu0 %v26
  %172 = vmatpush.msra.mxu0 %v25
  %173 = vmatpush.msra.mxu0 %v24
  %174 = vmatpush.msra.mxu0 %v23
  %175 = vmatpush.msra.mxu0 %v22
  %176 = vmatmul.f32.gmra.mxu0 %v157
  %v177 = vpop.f32.mrf.mxu0
  %v178 = vadd.f32 0.0, %v177
  %179 = vdwg.mxu0
  %v180 = vadd.f32 %v159, %v178
  %v181 = vtanh.pop %v180
  %s182 = scalar_lea.vmem %s0, 48
  %v183 = vld [vmem:[%s182] sm:$0xff]
  %184 = vmatpush.msra.mxu0 %v37
  %185 = vmatpush.msra.mxu0 %v36
  %186 = vmatpush.msra.mxu0 %v35
  %187 = vmatpush.msra.mxu0 %v34
  %188 = vmatpush.msra.mxu0 %v33
  %189 = vmatpush.msra.mxu0 %v32
  %190 = vmatpush.msra.mxu0 %v31
  %191 = vmatpush.msra.mxu0 %v30
  %192 = vmatpush.msra.mxu0 %v29
  %193 = vmatpush.msra.mxu0 %v28
  %194 = vmatpush.msra.mxu0 %v27
  %195 = vmatpush.msra.mxu0 %v26
  %196 = vmatpush.msra.mxu0 %v25
  %197 = vmatpush.msra.mxu0 %v24
  %198 = vmatpush.msra.mxu0 %v23
  %199 = vmatpush.msra.mxu0 %v22
  %200 = vmatmul.f32.gmra.mxu0 %v181
  %v201 = vpop.f32.mrf.mxu0
  %v202 = vadd.f32 0.0, %v201
  %203 = vdwg.mxu0
  %v204 = vadd.f32 %v183, %v202
  %v205 = vtanh.pop %v204
  %s206 = scalar_lea.vmem %s0, 56
  %v207 = vld [vmem:[%s206] sm:$0xff]
  %208 = vmatpush.msra.mxu0 %v37
  %209 = vmatpush.msra.mxu0 %v36
  %210 = vmatpush.msra.mxu0 %v35
  %211 = vmatpush.msra.mxu0 %v34
  %212 = vmatpush.msra.mxu0 %v33
  %213 = vmatpush.msra.mxu0 %v32
  %214 = vmatpush.msra.mxu0 %v31
  %215 = vmatpush.msra.mxu0 %v30
  %216 = vmatpush.msra.mxu0 %v29
  %217 = vmatpush.msra.mxu0 %v28
  %218 = vmatpush.msra.mxu0 %v27
  %219 = vmatpush.msra.mxu0 %v26
  %220 = vmatpush.msra.mxu0 %v25
  %221 = vmatpush.msra.mxu0 %v24
  %222 = vmatpush.msra.mxu0 %v23
  %223 = vmatpush.msra.mxu0 %v22
  %224 = vmatmul.f32.gmra.mxu0 %v205
  %v225 = vpop.f32.mrf.mxu0
  %v226 = vadd.f32 0.0, %v225
  %227 = vdwg.mxu0
  %v228 = vadd.f32 %v207, %v226
  %v229 = vtanh.pop %v228
  %230 = vst [vmem:[#allocation2] sm:$0xff] %v229
  // Predicated region
  $region22: #{recurrent_nn_forward.3} parent=0 // pred_check
    %p231 = pneg %p17
  $region23: #{recurrent_nn_forward.3} parent=0 // pred_check_branch
    %233 = sbr.rel (%p231) target = $region25
  $region24: #{recurrent_nn_forward.3} parent=0 // pred_region
    %v234 = vld [vmem:[%s2] sm:$0xff]
    %v235 = vld [vmem:[%s2 + $0x8] sm:$0xff]
    %v236 = vld [vmem:[%s2 + $0x10] sm:$0xff]
    %v237 = vld [vmem:[%s2 + $0x18] sm:$0xff]
    %v238 = vld [vmem:[%s2 + $0x20] sm:$0xff]
    %v239 = vld [vmem:[%s2 + $0x28] sm:$0xff]
    %v240 = vld [vmem:[%s2 + $0x30] sm:$0xff]
    %v241 = vld [vmem:[%s2 + $0x38] sm:$0xff]
    %v242 = vld [vmem:[%s2 + $0x40] sm:$0xff]
    %v243 = vld [vmem:[%s2 + $0x48] sm:$0xff]
    %v244 = vld [vmem:[%s2 + $0x50] sm:$0xff]
    %v245 = vld [vmem:[%s2 + $0x58] sm:$0xff]
    %v246 = vld [vmem:[%s2 + $0x60] sm:$0xff]
    %v247 = vld [vmem:[%s2 + $0x68] sm:$0xff]
    %v248 = vld [vmem:[%s2 + $0x70] sm:$0xff]
    %v249 = vld [vmem:[%s2 + $0x78] sm:$0xff]
    %v250 = vld [vmem:[%s3] sm:$0x1]
    %v252 = vperm.slane %v250, 0
    %254 = vmatpush.msra.mxu0 %v249
    %255 = vmatpush.msra.mxu0 %v248
    %256 = vmatpush.msra.mxu0 %v247
    %257 = vmatpush.msra.mxu0 %v246
    %258 = vmatpush.msra.mxu0 %v245
    %259 = vmatpush.msra.mxu0 %v244
    %260 = vmatpush.msra.mxu0 %v243
    %261 = vmatpush.msra.mxu0 %v242
    %262 = vmatpush.msra.mxu0 %v241
    %263 = vmatpush.msra.mxu0 %v240
    %264 = vmatpush.msra.mxu0 %v239
    %265 = vmatpush.msra.mxu0 %v238
    %266 = vmatpush.msra.mxu0 %v237
    %267 = vmatpush.msra.mxu0 %v236
    %268 = vmatpush.msra.mxu0 %v235
    %269 = vmatpush.msra.mxu0 %v234
    %270 = vmatmul.f32.gmra.mxu0 %v229
    %v271 = vpop.f32.mrf.mxu0
    %v272 = vadd.f32 %v252, %v271
    %273 = vdwg.mxu0
    %274 = vst [vmem:[%s4] sm:$0xff] %v272
  $region25: #{recurrent_nn_forward.3} parent=0 // pred_fallthru
    _
  // Predicated region
  $region26: #{recurrent_nn_forward.3} parent=0 // pred_check
    _
  $region27: #{recurrent_nn_forward.3} parent=0 // pred_check_branch
    %276 = sbr.rel (0) target = $region29
  $region28: #{recurrent_nn_forward.3} parent=0 // pred_region
    _
  $region29: #{recurrent_nn_forward.3} parent=0 // pred_fallthru
    _
  // Predicated region
  $region30: #{recurrent_nn_forward.3} parent=0 // pred_check
    _
  $region31: #{recurrent_nn_forward.3} parent=0 // pred_check_branch
    %278 = sbr.rel (0) target = $region33
  $region32: #{recurrent_nn_forward.3} parent=0 // pred_region
    _
  $region33: #{recurrent_nn_forward.3} parent=0 // pred_fallthru
    _

</llo_original>
